<compile_context>
chip_gen: v5e
topology: v5e:2x2
jax: 0.10.0
libtpu: 0.0.40
codegen_flags: <defaults>
</compile_context>

<pallas_src>
import jax
import jax.numpy as jnp
from jax.experimental import pallas as pl
from jax.experimental.pallas import tpu as pltpu

_LANES = 128  # TPU vreg lane width


def _linear_kernel(x_ref, w_ref, b_ref, o_ref):
    # o = x @ W_t + b with W_t already (F, C_pad): MXU consumes a (K, N) RHS,
    # output tile is lane-dense (N = multiple of 128).
    acc = jnp.dot(x_ref[...], w_ref[...], preferred_element_type=jnp.float32)
    o_ref[...] = (acc + b_ref[...]).astype(o_ref.dtype)


@jax.jit
def my_loss_forward(x, weight, bias):
    """Replicates MyLoss.forward hot path: preb = fc1(x).

    `weight` is the nn.Linear weight of shape (C, F); `bias` has shape (C,).
    The PyTorch forward's `target` argument is dead (never used before `pass`)
    and is intentionally not part of this jitted computation.
    """
    B, F = x.shape
    C = weight.shape[0]
    C_pad = ((C + _LANES - 1) // _LANES) * _LANES  # lane-dense class dim

    # (C, F) -> (F, C_pad): transpose + zero-pad classes up to a 128-lane
    # multiple. Done once in the wrapper (cheap XLA ops, fused under jit).
    w_t = jnp.zeros((F, C_pad), weight.dtype).at[:, :C].set(weight.T)
    b_pad = jnp.zeros((1, C_pad), bias.dtype).at[:, :C].set(bias)

    cost = pl.CostEstimate(
        flops=2 * B * F * C_pad,
        transcendentals=0,
        bytes_accessed=(x.size * x.dtype.itemsize
                        + w_t.size * w_t.dtype.itemsize
                        + b_pad.size * b_pad.dtype.itemsize
                        + B * C_pad * x.dtype.itemsize),
    )

    preb_pad = pl.pallas_call(
        _linear_kernel,
        out_shape=jax.ShapeDtypeStruct((B, C_pad), x.dtype),
        in_specs=[
            pl.BlockSpec(memory_space=pltpu.MemorySpace.VMEM),  # x     (B, F)
            pl.BlockSpec(memory_space=pltpu.MemorySpace.VMEM),  # w_t   (F, C_pad)
            pl.BlockSpec(memory_space=pltpu.MemorySpace.VMEM),  # bias  (1, C_pad)
        ],
        out_specs=pl.BlockSpec(memory_space=pltpu.MemorySpace.VMEM),
        cost_estimate=cost,
    )(x, w_t, b_pad)

    # Slice the real classes back out (metadata-level under jit).
    # TODO(synk): the original PyTorch forward ends with `pass` (returns None);
    # we return the computed fc1 output instead of discarding it.
    return preb_pad[:, :C]


if __name__ == "__main__":
    # Small shapes consistent with the module: feat_dim=32, num_classes=16, batch=8.
    batch, feat_dim, num_classes = 8, 32, 16

    key = jax.random.PRNGKey(0)
    kx, kt, kw, kb = jax.random.split(key, 4)

    x = jax.random.normal(kx, (batch, feat_dim), dtype=jnp.float32)
    # `target` exists only for parity with the PyTorch forward signature; it is
    # dead in the original forward and deliberately not passed to the kernel.
    target = jax.random.randint(kt, (batch,), 0, num_classes, dtype=jnp.int32)

    # Deterministic nn.Linear-style init: U(-1/sqrt(feat_dim), 1/sqrt(feat_dim)).
    bound = 1.0 / (feat_dim ** 0.5)
    fc1_weight = jax.random.uniform(kw, (num_classes, feat_dim),
                                    minval=-bound, maxval=bound,
                                    dtype=jnp.float32)
    fc1_bias = jax.random.uniform(kb, (num_classes,),
                                  minval=-bound, maxval=bound,
                                  dtype=jnp.float32)

    preb = my_loss_forward(x, fc1_weight, fc1_bias)
    preb = jax.block_until_ready(preb)

    # Correctness check against plain-JAX reference.
    ref = x @ fc1_weight.T + fc1_bias
    assert preb.shape == (batch, num_classes)
    assert jnp.allclose(preb, ref, atol=1e-5, rtol=1e-5)

    print("KERNEL_OK")
</pallas_src>

<mosaic_0001>
module attributes {stable_mosaic.version = 11 : i64} {
  func.func @_linear_kernel(%arg0: memref<8x32xf32, #tpu.memory_space<vmem>>, %arg1: memref<32x128xf32, #tpu.memory_space<vmem>>, %arg2: memref<1x128xf32, #tpu.memory_space<vmem>>, %arg3: memref<8x128xf32, #tpu.memory_space<vmem>>) attributes {dimension_semantics = [], scalar_prefetch = 0 : i64, scratch_operands = 0 : i64, tpu.core_type = #tpu.core_type<tc>} {
    %c0 = arith.constant 0 : index
    %c0_0 = arith.constant 0 : index
    %0 = vector.load %arg0[%c0, %c0_0] : memref<8x32xf32, #tpu.memory_space<vmem>>, vector<8x32xf32>
    %c0_1 = arith.constant 0 : index
    %c0_2 = arith.constant 0 : index
    %1 = vector.load %arg1[%c0_1, %c0_2] : memref<32x128xf32, #tpu.memory_space<vmem>>, vector<32x128xf32>
    %cst = arith.constant dense<0.000000e+00> : vector<8x128xf32>
    %2 = tpu.matmul %0, %1, %cst {dimension_numbers = #tpu.dot_dimension_numbers<[1], [0], [0], [1], [0, 0, 1, 1], [], []>} : vector<8x32xf32>, vector<32x128xf32>, vector<8x128xf32> -> vector<8x128xf32>
    %c0_3 = arith.constant 0 : index
    %c0_4 = arith.constant 0 : index
    %3 = vector.load %arg2[%c0_3, %c0_4] : memref<1x128xf32, #tpu.memory_space<vmem>>, vector<1x128xf32>
    %4 = vector.broadcast %3 : vector<1x128xf32> to vector<8x128xf32>
    %5 = arith.addf %2, %4 : vector<8x128xf32>
    %c0_5 = arith.constant 0 : index
    %c0_6 = arith.constant 0 : index
    %6 = vector.load %arg3[%c0_5, %c0_6] : memref<8x128xf32, #tpu.memory_space<vmem>>, vector<8x128xf32>
    tpu.vector_store %arg3[%c0_5, %c0_6], %5 {strides = array<i32>} : memref<8x128xf32, #tpu.memory_space<vmem>>, vector<8x128xf32>,
    return
  }
}

</mosaic_0001>

<llo_original>
// kernel: my_loss_forward.1
$region0: #{my_loss_forward.1}
  #allocation0 [shape = 'u32[]', space=smem, size = 0x4, offset = 0x4, fixed_abs, tag = 'smem constant byte address 0x4 - core index']
  #allocation1 [shape = 'u32[72,128]{1,0:T(1,128)}', space=vmem, size = 0x9000, scoped, tag = 'internal scratch']
  %s0 = inlined_call_operand.vmem [shape: f32[8,32], index: 0, kind: input, shape index: {}]
  %s1 = inlined_call_operand.vmem [shape: f32[32,128], index: 1, kind: input, shape index: {}]
  %s2 = inlined_call_operand.vmem [shape: f32[1,128], index: 2, kind: input, shape index: {}]
  %s3 = inlined_call_operand.hbm [shape: f32[8,128], index: 3, kind: output, shape index: {}]
  %s4 = sld [smem:[#allocation0]]
  $region22: #{my_loss_forward.1} parent=0
    _
  %s6 = ssub.s32 1, %s4
  %s7 = scalar_select 0, %s6, %s4
  $region1: #{my_loss_forward.1} parent=0
    #allocation2 [shape = 'u8[4096]{0}', space=vmem, size = 0x1000, scoped, tag = 'output window, operand 0, single buffered']
    #allocation3 [shape = 's32[1]{0}', space=sflag, size = 0x4, scoped, tag = 'scoped memory for my_loss_forward.1']
    %8 = vsyncpa [#allocation3], 0
    // Predicated region
    $region2: #{my_loss_forward.1} parent=1 // pred_check
      _
    $region3: #{my_loss_forward.1} parent=1 // pred_check_branch
      %10 = sbr.rel (0) target = $region5
    $region4: #{my_loss_forward.1} parent=1 // pred_region
      _
    $region5: #{my_loss_forward.1} parent=1 // pred_fallthru
      _
    // Predicated region
    $region6: #{my_loss_forward.1} parent=1 // pred_check
      _
    $region7: #{my_loss_forward.1} parent=1 // pred_check_branch
      %12 = sbr.rel (0) target = $region9
    $region8: #{my_loss_forward.1} parent=1 // pred_region
      _
    $region9: #{my_loss_forward.1} parent=1 // pred_fallthru
      _
    // Predicated region
    $region10: #{my_loss_forward.1} parent=1 // pred_check
      _
    $region11: #{my_loss_forward.1} parent=1 // pred_check_branch
      %14 = sbr.rel (0) target = $region13
    $region12: #{my_loss_forward.1} parent=1 // pred_region
      _
    $region13: #{my_loss_forward.1} parent=1 // pred_fallthru
      _
    %v15 = vld [vmem:[%s0] sm:$0xff]
    %v16 = vld [vmem:[%s1] sm:$0xff]
    %v17 = vld [vmem:[%s1 + $0x8] sm:$0xff]
    %v18 = vld [vmem:[%s1 + $0x10] sm:$0xff]
    %v19 = vld [vmem:[%s1 + $0x18] sm:$0xff]
    %v20 = vld [vmem:[%s2] sm:$0x1]
    %v22 = vperm.slane %v20, 0
    %vm24 = vcmask 261120
    %v26 = vsel %vm24, %v15, 0
    %28 = vmatpush.msra.mxu0 0.0
    %29 = vmatpush.msra.mxu0 0.0
    %30 = vmatpush.msra.mxu0 0.0
    %31 = vmatpush.msra.mxu0 0.0
    %32 = vmatpush.msra.mxu0 0.0
    %33 = vmatpush.msra.mxu0 0.0
    %34 = vmatpush.msra.mxu0 0.0
    %35 = vmatpush.msra.mxu0 0.0
    %36 = vmatpush.msra.mxu0 0.0
    %37 = vmatpush.msra.mxu0 0.0
    %38 = vmatpush.msra.mxu0 0.0
    %39 = vmatpush.msra.mxu0 0.0
    %40 = vmatpush.msra.mxu0 %v19
    %41 = vmatpush.msra.mxu0 %v18
    %42 = vmatpush.msra.mxu0 %v17
    %43 = vmatpush.msra.mxu0 %v16
    %44 = vmatmul.f32.gmra.mxu0 %v26
    %v45 = vpop.f32.mrf.mxu0
    %v46 = vadd.f32 %v22, %v45
    %47 = vdwg.mxu0
    %48 = vst [vmem:[#allocation2] sm:$0xff] %v46
    // Predicated region
    $region14: #{my_loss_forward.1} parent=1 // pred_check
      _
    $region15: #{my_loss_forward.1} parent=1 // pred_check_branch
      %50 = sbr.rel (0) target = $region17
    $region16: #{my_loss_forward.1} parent=1 // pred_region
      %52 = vsyncadd [#allocation3], 0
      %s54 = sshll.u32 [#allocation2], 4
      %s55 = int_to_ptr.vmem [resolvable:$true] %s54
      %s56 = sshll.u32 %s3, 4
      %s57 = int_to_ptr.hbm [resolvable:$true] %s56
      %59 = dma.vmem_to_hbm [thread:$0]  %s55, 128, %s57, [#allocation3]
    $region17: #{my_loss_forward.1} parent=1 // pred_fallthru
      _
    // Predicated region
    $region18: #{my_loss_forward.1} parent=1 // pred_check
      _
    $region19: #{my_loss_forward.1} parent=1 // pred_check_branch
      %61 = sbr.rel (0) target = $region21
    $region20: #{my_loss_forward.1} parent=1 // pred_region
      %63 = dma.done [#allocation3], 128
    $region21: #{my_loss_forward.1} parent=1 // pred_fallthru
      _
    %64 = vsyncpa [#allocation3], 1

</llo_original>
